<compile_context>
chip_gen: v5e
topology: v5e:2x2
jax: 0.10.0
libtpu: 0.0.40
codegen_flags: <defaults>
</compile_context>

<pallas_src>
import math

import jax
import jax.numpy as jnp
from jax.experimental import pallas as pl
from jax.experimental.pallas import tpu as pltpu


def _causal_conv_kernel(w_ref, b_ref, x_ref, o_ref):
    # w_ref: (3, d_in, d_out)   pre-transposed taps, w_ref[k] = weight[:, :, 0, k].T
    # b_ref: (1, d_out)         conv bias
    # x_ref: (1, T, N, d_in)    one batch slice of X
    # o_ref: (1, T+1, N+2, d_out)
    _, T, N, d_in = x_ref.shape
    d_out = o_ref.shape[-1]

    # Big MXU-friendly LHS: flatten (T, N) into the row axis.
    x = x_ref[0].reshape(T * N, d_in)                                     # (T*N, d_in)

    y0 = jnp.dot(x, w_ref[0], preferred_element_type=jnp.float32).reshape(T, N, d_out)
    y1 = jnp.dot(x, w_ref[1], preferred_element_type=jnp.float32).reshape(T, N, d_out)
    y2 = jnp.dot(x, w_ref[2], preferred_element_type=jnp.float32).reshape(T, N, d_out)

    # Output time t (>=1) reads input times t-2, t-1, t  (zeros outside [0, T-1]).
    # With s = t-1 in [0, T-1]:  core[s] = y0[s-1] + y1[s] + y2[s+1].
    zrow = jnp.zeros((1, N, d_out), jnp.float32)
    y0s = jnp.concatenate([zrow, y0[:-1]], axis=0)                        # y0[s-1]
    y2s = jnp.concatenate([y2[1:], zrow], axis=0)                         # y2[s+1]
    inner = y0s + y1 + y2s                                                # (T, N, d_out)

    # Conv2d height padding (padding[0]=1): output rows n'=0 and n'=N+1 only
    # see zero-padded input, so they are exactly `bias`.
    zcol = jnp.zeros((T, 1, d_out), jnp.float32)
    body = jnp.concatenate([zcol, inner, zcol], axis=1) + b_ref[...][None]  # (T, N+2, d_out)

    # F.pad(..., (1, 0)) on the time axis: an all-zero frame at t=0 (no bias).
    zframe = jnp.zeros((1, N + 2, d_out), jnp.float32)
    o_ref[0] = jnp.concatenate([zframe, body], axis=0).astype(o_ref.dtype)


def causal_conv_forward(X, weight, bias):
    """
    X:      (b, T, N, d_in)     float32
    weight: (d_out, d_in, 1, 3) nn.Conv2d weight (OIHW)
    bias:   (d_out,)
    returns (b, T+1, N+2, d_out) -- matches CausalConv.forward
    """
    b, T, N, d_in = X.shape
    d_out, d_in_w, kh, kw = weight.shape
    assert d_in_w == d_in and kh == 1 and kw == 3, "kernel assumes kernel_size=(1,3)"

    # Pre-transpose the taps ONCE in the wrapper (no per-grid-step transpose).
    w_taps = jnp.transpose(weight[:, :, 0, :], (2, 1, 0))   # (3, d_in, d_out)
    bias2 = bias.reshape(1, d_out)

    # TODO(synk): for very long T, tile the time axis with a one-frame halo per
    # block instead of loading the whole (T, N, d_in) slab per grid step.
    out = pl.pallas_call(
        _causal_conv_kernel,
        out_shape=jax.ShapeDtypeStruct((b, T + 1, N + 2, d_out), X.dtype),
        grid_spec=pltpu.PrefetchScalarGridSpec(
            num_scalar_prefetch=0,
            grid=(b,),
            in_specs=[
                pl.BlockSpec((3, d_in, d_out), lambda i: (0, 0, 0)),     # taps (shared)
                pl.BlockSpec((1, d_out), lambda i: (0, 0)),              # bias (shared)
                pl.BlockSpec((1, T, N, d_in), lambda i: (i, 0, 0, 0)),   # X slice
            ],
            out_specs=pl.BlockSpec((1, T + 1, N + 2, d_out), lambda i: (i, 0, 0, 0)),
        ),
        compiler_params=pltpu.CompilerParams(
            dimension_semantics=("parallel",),
        ),
    )(w_taps, bias2, X)
    return out


if __name__ == "__main__":
    # Shapes implied by the module: X (b, T, N, d); in_channels = out_channels = d.
    b, T, N, d_in, d_out = 2, 8, 16, 32, 32

    key = jax.random.PRNGKey(0)
    kx, kw_, kb = jax.random.split(key, 3)

    X = jax.random.normal(kx, (b, T, N, d_in), dtype=jnp.float32)
    fan_in = d_in * 1 * 3
    bound = 1.0 / math.sqrt(fan_in)   # nn.Conv2d default (kaiming-uniform-like) bound
    W = jax.random.uniform(kw_, (d_out, d_in, 1, 3), jnp.float32, -bound, bound)
    bias = jax.random.uniform(kb, (d_out,), jnp.float32, -bound, bound)

    out = causal_conv_forward(X, W, bias)
    out = jax.block_until_ready(out)

    # Pure-JAX reference reproducing the PyTorch module exactly.
    Xp = jnp.transpose(X, (0, 3, 2, 1))                                  # (b, d, N, T)
    ref = jax.lax.conv_general_dilated(
        Xp, W, window_strides=(1, 1), padding=((1, 1), (1, 1)),
        dimension_numbers=("NCHW", "OIHW", "NCHW"),
        precision=jax.lax.Precision.HIGHEST)
    ref = ref + bias[None, :, None, None]
    ref = jnp.pad(ref, ((0, 0), (0, 0), (0, 0), (1, 0)))                 # causal left-pad on T
    ref = jnp.transpose(ref, (0, 3, 2, 1))                               # (b, T+1, N+2, d_out)

    assert out.shape == (b, T + 1, N + 2, d_out), out.shape
    assert jnp.allclose(out, ref, atol=1e-3, rtol=1e-3), float(jnp.max(jnp.abs(out - ref)))

    print("KERNEL_OK")
</pallas_src>

<mosaic_0001>
module attributes {stable_mosaic.version = 11 : i64} {
  func.func @_causal_conv_kernel(%arg0: i32, %arg1: memref<3x32x32xf32, #tpu.memory_space<vmem>>, %arg2: memref<1x32xf32, #tpu.memory_space<vmem>>, %arg3: memref<1x8x16x32xf32, #tpu.memory_space<vmem>>, %arg4: memref<1x9x18x32xf32, #tpu.memory_space<vmem>>) attributes {dimension_semantics = [#tpu.dimension_semantics<parallel>], iteration_bounds = array<i64: 2>, scalar_prefetch = 0 : i64, scratch_operands = 0 : i64, tpu.core_type = #tpu.core_type<tc>, window_params = [{pipeline_mode = #tpu.pipeline_mode<synchronous>, transform_indices = @transform_0, window_bounds = array<i64: 3, 32, 32>}, {pipeline_mode = #tpu.pipeline_mode<synchronous>, transform_indices = @transform_1, window_bounds = array<i64: 1, 32>}, {transform_indices = @transform_2, window_bounds = array<i64: 1, 8, 16, 32>}, {transform_indices = @transform_3, window_bounds = array<i64: 1, 9, 18, 32>}]} {
    %c0 = arith.constant 0 : index
    %c0_0 = arith.constant 0 : index
    %c0_1 = arith.constant 0 : index
    %c0_2 = arith.constant 0 : index
    %0 = vector.load %arg3[%c0, %c0_0, %c0_1, %c0_2] : memref<1x8x16x32xf32, #tpu.memory_space<vmem>>, vector<1x8x16x32xf32>
    %1 = vector.shape_cast %0 : vector<1x8x16x32xf32> to vector<8x16x32xf32>
    %2 = vector.shape_cast %1 : vector<8x16x32xf32> to vector<128x32xf32>
    %c0_3 = arith.constant 0 : index
    %c0_4 = arith.constant 0 : index
    %c0_5 = arith.constant 0 : index
    %3 = vector.load %arg1[%c0_3, %c0_4, %c0_5] : memref<3x32x32xf32, #tpu.memory_space<vmem>>, vector<1x32x32xf32>
    %4 = vector.shape_cast %3 : vector<1x32x32xf32> to vector<32x32xf32>
    %cst = arith.constant dense<0.000000e+00> : vector<128x32xf32>
    %5 = tpu.matmul %2, %4, %cst {dimension_numbers = #tpu.dot_dimension_numbers<[1], [0], [0], [1], [0, 0, 1, 1], [], []>} : vector<128x32xf32>, vector<32x32xf32>, vector<128x32xf32> -> vector<128x32xf32>
    %6 = vector.shape_cast %5 : vector<128x32xf32> to vector<8x16x32xf32>
    %c1 = arith.constant 1 : index
    %c0_6 = arith.constant 0 : index
    %c0_7 = arith.constant 0 : index
    %7 = vector.load %arg1[%c1, %c0_6, %c0_7] : memref<3x32x32xf32, #tpu.memory_space<vmem>>, vector<1x32x32xf32>
    %8 = vector.shape_cast %7 : vector<1x32x32xf32> to vector<32x32xf32>
    %cst_8 = arith.constant dense<0.000000e+00> : vector<128x32xf32>
    %9 = tpu.matmul %2, %8, %cst_8 {dimension_numbers = #tpu.dot_dimension_numbers<[1], [0], [0], [1], [0, 0, 1, 1], [], []>} : vector<128x32xf32>, vector<32x32xf32>, vector<128x32xf32> -> vector<128x32xf32>
    %10 = vector.shape_cast %9 : vector<128x32xf32> to vector<8x16x32xf32>
    %c2 = arith.constant 2 : index
    %c0_9 = arith.constant 0 : index
    %c0_10 = arith.constant 0 : index
    %11 = vector.load %arg1[%c2, %c0_9, %c0_10] : memref<3x32x32xf32, #tpu.memory_space<vmem>>, vector<1x32x32xf32>
    %12 = vector.shape_cast %11 : vector<1x32x32xf32> to vector<32x32xf32>
    %cst_11 = arith.constant dense<0.000000e+00> : vector<128x32xf32>
    %13 = tpu.matmul %2, %12, %cst_11 {dimension_numbers = #tpu.dot_dimension_numbers<[1], [0], [0], [1], [0, 0, 1, 1], [], []>} : vector<128x32xf32>, vector<32x32xf32>, vector<128x32xf32> -> vector<128x32xf32>
    %14 = vector.shape_cast %13 : vector<128x32xf32> to vector<8x16x32xf32>
    %cst_12 = arith.constant 0.000000e+00 : f32
    %15 = vector.broadcast %cst_12 : f32 to vector<1x16x32xf32>
    %16 = vector.extract_strided_slice %6 {offsets = [0, 0, 0], sizes = [7, 16, 32], strides = [1, 1, 1]} : vector<8x16x32xf32> to vector<7x16x32xf32>
    %17 = tpu.concatenate %15, %16 in 0 : vector<1x16x32xf32>, vector<7x16x32xf32> -> vector<8x16x32xf32>
    %18 = vector.extract_strided_slice %14 {offsets = [1, 0, 0], sizes = [7, 16, 32], strides = [1, 1, 1]} : vector<8x16x32xf32> to vector<7x16x32xf32>
    %19 = tpu.concatenate %18, %15 in 0 : vector<7x16x32xf32>, vector<1x16x32xf32> -> vector<8x16x32xf32>
    %20 = arith.addf %17, %10 : vector<8x16x32xf32>
    %21 = arith.addf %20, %19 : vector<8x16x32xf32>
    %cst_13 = arith.constant 0.000000e+00 : f32
    %22 = vector.broadcast %cst_13 : f32 to vector<8x1x32xf32>
    %23 = tpu.concatenate %22, %21, %22 in 1 : vector<8x1x32xf32>, vector<8x16x32xf32>, vector<8x1x32xf32> -> vector<8x18x32xf32>
    %c0_14 = arith.constant 0 : index
    %c0_15 = arith.constant 0 : index
    %24 = vector.load %arg2[%c0_14, %c0_15] : memref<1x32xf32, #tpu.memory_space<vmem>>, vector<1x32xf32>
    %25 = vector.shape_cast %24 : vector<1x32xf32> to vector<1x1x32xf32>
    %26 = vector.broadcast %25 : vector<1x1x32xf32> to vector<8x18x32xf32>
    %27 = arith.addf %23, %26 : vector<8x18x32xf32>
    %cst_16 = arith.constant 0.000000e+00 : f32
    %28 = vector.broadcast %cst_16 : f32 to vector<1x18x32xf32>
    %29 = tpu.concatenate %28, %27 in 0 : vector<1x18x32xf32>, vector<8x18x32xf32> -> vector<9x18x32xf32>
    %c0_17 = arith.constant 0 : index
    %c0_18 = arith.constant 0 : index
    %c0_19 = arith.constant 0 : index
    %c0_20 = arith.constant 0 : index
    %30 = vector.load %arg4[%c0_17, %c0_18, %c0_19, %c0_20] : memref<1x9x18x32xf32, #tpu.memory_space<vmem>>, vector<1x9x18x32xf32>
    %31 = vector.shape_cast %30 : vector<1x9x18x32xf32> to vector<9x18x32xf32>
    %32 = vector.shape_cast %29 : vector<9x18x32xf32> to vector<1x9x18x32xf32>
    tpu.vector_store %arg4[%c0_17, %c0_18, %c0_19, %c0_20], %32 {strides = array<i32>} : memref<1x9x18x32xf32, #tpu.memory_space<vmem>>, vector<1x9x18x32xf32>,
    return
  }
  func.func @transform_0(%arg0: i32) -> (i32, i32, i32) {
    %c0_i32 = arith.constant 0 : i32
    %c0_i32_0 = arith.constant 0 : i32
    %c0_i32_1 = arith.constant 0 : i32
    %c0_i32_2 = arith.constant 0 : i32
    return %c0_i32, %c0_i32_0, %c0_i32_1 : i32, i32, i32
  }
  func.func @transform_1(%arg0: i32) -> (i32, i32) {
    %c0_i32 = arith.constant 0 : i32
    %c0_i32_0 = arith.constant 0 : i32
    %c0_i32_1 = arith.constant 0 : i32
    return %c0_i32, %c0_i32_0 : i32, i32
  }
  func.func @transform_2(%arg0: i32) -> (i32, i32, i32, i32) {
    %c0_i32 = arith.constant 0 : i32
    %c0_i32_0 = arith.constant 0 : i32
    %c0_i32_1 = arith.constant 0 : i32
    %c0_i32_2 = arith.constant 0 : i32
    return %arg0, %c0_i32, %c0_i32_0, %c0_i32_1 : i32, i32, i32, i32
  }
  func.func @transform_3(%arg0: i32) -> (i32, i32, i32, i32) {
    %c0_i32 = arith.constant 0 : i32
    %c0_i32_0 = arith.constant 0 : i32
    %c0_i32_1 = arith.constant 0 : i32
    %c0_i32_2 = arith.constant 0 : i32
    return %arg0, %c0_i32, %c0_i32_0, %c0_i32_1 : i32, i32, i32, i32
  }
}

</mosaic_0001>

<llo_original>
// kernel: tpu_custom_call.1
$region0: #{tpu_custom_call.1}
  #allocation0 [shape = 'u32[]', space=smem, size = 0x4, offset = 0x4, fixed_abs, tag = 'smem constant byte address 0x4 - core index']
  #allocation1 [shape = 'u32[72,128]{1,0:T(1,128)}', space=vmem, size = 0x9000, scoped, tag = 'internal scratch']
  %s0 = inlined_call_operand.hbm [shape: f32[3,32,32], index: 0, kind: input, shape index: {}]
  %s1 = inlined_call_operand.hbm [shape: f32[1,32], index: 1, kind: input, shape index: {}]
  %s2 = inlined_call_operand.hbm [shape: f32[2,8,16,32], index: 2, kind: input, shape index: {}]
  %s3 = inlined_call_operand.vmem [shape: f32[2,9,18,32], index: 3, kind: output, shape index: {}]
  %s4 = sld [smem:[#allocation0]]
  $region57: #{tpu_custom_call.1} parent=0
    _
  %s6 = ssub.s32 1, %s4
  %s7 = scalar_select 0, %s6, %s4
  $region1: #{tpu_custom_call.1} parent=0
    #allocation2 [shape = 'u8[49152]{0}', space=vmem, size = 0xc000, scoped, tag = 'input window, operand 0, single buffered']
    #allocation3 [shape = 's32[2]{0}', space=sflag, size = 0x8, scoped, tag = 'scoped memory for tpu_custom_call.1']
    #allocation4 [shape = 'u8[512]{0}', space=vmem, size = 0x400, scoped, tag = 'input window, operand 1, single buffered']
    #allocation5 [shape = 's32[1]{0}', space=sflag, size = 0x4, scoped, tag = 'scoped memory for tpu_custom_call.1']
    #allocation6 [shape = 'u8[131072]{0}', space=vmem, size = 0x20000, scoped, tag = 'input window, operand 2']
    %8 = vsyncpa [#allocation3], 0
    %9 = vsyncpa [#allocation5], 0
    loop: start=0, step=1, limit=4
    $region2: #{tpu_custom_call.1} parent=1 // loop_pre_header
      _
    $region3: #{tpu_custom_call.1} parent=1 // loop_header
      %s11 = sphi 0, %s15
      %p12 = scmp.ge.s32.totalorder %s11, 4
      %s19 = sphi 0, %s19
      %s21 = sphi 0, %s19
      %s22 = sphi 0, %s21
      %s36 = sphi 0, %s22
      %s40 = sphi 0, %s40
      %s42 = sphi 0, %s40
      %s43 = sphi 0, %s42
      %s57 = sphi 0, %s43
      %s63 = sphi 0, %s65
      %s66 = sphi 0, %s63
      %s67 = sphi 0, %s66
      %s83 = sphi 0, %s67
      %s89 = sphi 0, %s91
      %s92 = sphi 0, %s89
      %s93 = sphi 0, %s92
      %s109 = sphi 0, %s93
    $region4: #{tpu_custom_call.1} parent=1 // loop_header_branch
      %14 = sbr.rel (%p12) target = $region8
    $region5: #{tpu_custom_call.1} parent=1 // loop_body
      %s16 = ssub.s32 %s11, 1
      %s17 = ssub.s32 %s11, 2
      %s18 = sadd.s32 %s11, 1
      %s20 = sadd.s32 %s19, 1
      %p23 = scmp.eq.s32.totalorder %s11, 1
      %p24 = scmp.ne.s32.totalorder %s19, %s21
      %p25 = scmp.eq.s32.totalorder %s11, 0
      %p26 = por %p24, %p25
      %p27 = scmp.ne.s32.totalorder %s19, %s21
      %p28 = scmp.eq.s32.totalorder %s16, 1
      %p29 = por %p27, %p28
      %p30 = scmp.ne.s32.totalorder %s21, %s22
      %p31 = scmp.eq.s32.totalorder %s16, 0
      %p32 = por %p30, %p31
      %p33 = scmp.ne.s32.totalorder %s21, %s22
      %p34 = scmp.eq.s32.totalorder %s17, 1
      %p35 = por %p33, %p34
      %p37 = scmp.ne.s32.totalorder %s22, %s36
      %p38 = scmp.eq.s32.totalorder %s17, 0
      %p39 = por %p37, %p38
      %s41 = sadd.s32 %s40, 1
      %p44 = scmp.eq.s32.totalorder %s11, 1
      %p45 = scmp.ne.s32.totalorder %s40, %s42
      %p46 = scmp.eq.s32.totalorder %s11, 0
      %p47 = por %p45, %p46
      %p48 = scmp.ne.s32.totalorder %s40, %s42
      %p49 = scmp.eq.s32.totalorder %s16, 1
      %p50 = por %p48, %p49
      %p51 = scmp.ne.s32.totalorder %s42, %s43
      %p52 = scmp.eq.s32.totalorder %s16, 0
      %p53 = por %p51, %p52
      %p54 = scmp.ne.s32.totalorder %s42, %s43
      %p55 = scmp.eq.s32.totalorder %s17, 1
      %p56 = por %p54, %p55
      %p58 = scmp.ne.s32.totalorder %s43, %s57
      %p59 = scmp.eq.s32.totalorder %s17, 0
      %p60 = por %p58, %p59
      %s61 = ssub.s32 %s11, %s18
      %p62 = scmp.eq.s32.totalorder %s61, 0
      %s64 = sadd.s32 %s63, 1
      %s65 = scalar_select %p62, %s63, %s64
      %p68 = pneg %p62
      %p69 = scmp.eq.s32.totalorder %s11, 1
      %p70 = por %p68, %p69
      %p71 = scmp.ne.s32.totalorder %s63, %s66
      %p72 = scmp.eq.s32.totalorder %s11, 0
      %p73 = por %p71, %p72
      %p74 = scmp.ne.s32.totalorder %s63, %s66
      %p75 = scmp.eq.s32.totalorder %s16, 1
      %p76 = por %p74, %p75
      %p77 = scmp.ne.s32.totalorder %s66, %s67
      %p78 = scmp.eq.s32.totalorder %s16, 0
      %p79 = por %p77, %p78
      %p80 = scmp.ne.s32.totalorder %s66, %s67
      %p81 = scmp.eq.s32.totalorder %s17, 1
      %p82 = por %p80, %p81
      %p84 = scmp.ne.s32.totalorder %s67, %s83
      %p85 = scmp.eq.s32.totalorder %s17, 0
      %p86 = por %p84, %p85
      %s87 = ssub.s32 %s11, %s18
      %p88 = scmp.eq.s32.totalorder %s87, 0
      %s90 = sadd.s32 %s89, 1
      %s91 = scalar_select %p88, %s89, %s90
      %p94 = pneg %p88
      %p95 = scmp.eq.s32.totalorder %s11, 1
      %p96 = por %p94, %p95
      %p97 = scmp.ne.s32.totalorder %s89, %s92
      %p98 = scmp.eq.s32.totalorder %s11, 0
      %p99 = por %p97, %p98
      %p100 = scmp.ne.s32.totalorder %s89, %s92
      %p101 = scmp.eq.s32.totalorder %s16, 1
      %p102 = por %p100, %p101
      %p103 = scmp.ne.s32.totalorder %s92, %s93
      %p104 = scmp.eq.s32.totalorder %s16, 0
      %p105 = por %p103, %p104
      %p106 = scmp.ne.s32.totalorder %s92, %s93
      %p107 = scmp.eq.s32.totalorder %s17, 1
      %p108 = por %p106, %p107
      %p110 = scmp.ne.s32.totalorder %s93, %s109
      %p111 = scmp.eq.s32.totalorder %s17, 0
      %p112 = por %p110, %p111
      %p113 = scmp.le.s32.totalorder 1, %s11
      %p114 = scmp.lt.s32.totalorder %s11, 3
      %p115 = pnand %p113, %p114
      %p116 = pneg %p115
      // Predicated region
      $region9: #{tpu_custom_call.1} parent=5 // pred_check
        _
      $region10: #{tpu_custom_call.1} parent=5 // pred_check_branch
        %118 = sbr.rel (%p115) target = $region12
      $region11: #{tpu_custom_call.1} parent=5 // pred_region
        %s119 = ssub.s32 %s11, 1
        // Predicated region
        $region13: #{tpu_custom_call.1} parent=11 // pred_check
          %p120 = pneg %p32
        $region14: #{tpu_custom_call.1} parent=11 // pred_check_branch
          %122 = sbr.rel (%p120) target = $region16
        $region15: #{tpu_custom_call.1} parent=11 // pred_region
          %124 = vsyncadd [#allocation3], 0
          %s125 = sshll.u32 %s0, 4
          %s126 = int_to_ptr.hbm [resolvable:$true] %s125
          %s127 = sshll.u32 [#allocation2], 4
          %s128 = int_to_ptr.vmem [resolvable:$true] %s127
          %133 = dma.hbm_to_vmem [thread:$0]  %s126, 1536, %s128, [#allocation3], 128, 128, 8
        $region16: #{tpu_custom_call.1} parent=11 // pred_fallthru
          _
        // Predicated region
        $region17: #{tpu_custom_call.1} parent=11 // pred_check
          %p134 = pneg %p53
        $region18: #{tpu_custom_call.1} parent=11 // pred_check_branch
          %136 = sbr.rel (%p134) target = $region20
        $region19: #{tpu_custom_call.1} parent=11 // pred_region
          %138 = vsyncadd [#allocation5], 0
          %s140 = sshll.u32 %s1, 4
          %s141 = int_to_ptr.hbm [resolvable:$true] %s140
          %s142 = sshll.u32 [#allocation4], 4
          %s143 = int_to_ptr.vmem [resolvable:$true] %s142
          %145 = dma.hbm_to_vmem [thread:$0]  %s141, 16, %s143, [#allocation5]
        $region20: #{tpu_custom_call.1} parent=11 // pred_fallthru
          _
      $region12: #{tpu_custom_call.1} parent=5 // pred_fallthru
        _
      %p146 = scmp.lt.s32.totalorder %s11, 2
      // Predicated region
      $region21: #{tpu_custom_call.1} parent=5 // pred_check
        %p147 = pneg %p146
      $region22: #{tpu_custom_call.1} parent=5 // pred_check_branch
        %149 = sbr.rel (%p147) target = $region24
      $region23: #{tpu_custom_call.1} parent=5 // pred_region
        // Predicated region
        $region25: #{tpu_custom_call.1} parent=23 // pred_check
          %p150 = pneg %p73
        $region26: #{tpu_custom_call.1} parent=23 // pred_check_branch
          %152 = sbr.rel (%p150) target = $region28
        $region27: #{tpu_custom_call.1} parent=23 // pred_region
          %s153 = sand.u32 %s11, 1
          %s154 = scalar_lea.sflag [#allocation3], %s153
          %s155 = sand.u32 %s63, 1
          %s156 = smul.addr %s155, 128
          %s157 = scalar_lea.vmem [#allocation6], %s156
          %159 = vsyncadd %s154, 0
          %s160 = smul.addr %s11, 16
          %s161 = smul.addr %s160, 8
          %s162 = scalar_lea.hbm %s2, %s161
          %s163 = sshll.u32 %s162, 4
          %s164 = int_to_ptr.hbm [resolvable:$true] %s163
          %s165 = sshll.u32 %s157, 4
          %s166 = int_to_ptr.vmem [resolvable:$true] %s165
          %171 = dma.hbm_to_vmem [thread:$0]  %s164, 2048, %s166, %s154, 128, 128, 8
        $region28: #{tpu_custom_call.1} parent=23 // pred_fallthru
          _
      $region24: #{tpu_custom_call.1} parent=5 // pred_fallthru
        _
      %p172 = scmp.le.s32.totalorder 1, %s11
      %p173 = scmp.lt.s32.totalorder %s11, 3
      %p174 = pnand %p172, %p173
      %p175 = pneg %p174
      // Predicated region
      $region29: #{tpu_custom_call.1} parent=5 // pred_check
        _
      $region30: #{tpu_custom_call.1} parent=5 // pred_check_branch
        %177 = sbr.rel (%p174) target = $region32
      $region31: #{tpu_custom_call.1} parent=5 // pred_region
        %s178 = ssub.s32 %s11, 1
        // Predicated region
        $region33: #{tpu_custom_call.1} parent=31 // pred_check
          %p179 = pneg %p32
        $region34: #{tpu_custom_call.1} parent=31 // pred_check_branch
          %181 = sbr.rel (%p179) target = $region36
        $region35: #{tpu_custom_call.1} parent=31 // pred_region
          %183 = dma.done [#allocation3], 1536
        $region36: #{tpu_custom_call.1} parent=31 // pred_fallthru
          _
        // Predicated region
        $region37: #{tpu_custom_call.1} parent=31 // pred_check
          %p184 = pneg %p53
        $region38: #{tpu_custom_call.1} parent=31 // pred_check_branch
          %186 = sbr.rel (%p184) target = $region40
        $region39: #{tpu_custom_call.1} parent=31 // pred_region
          %188 = dma.done [#allocation5], 16
        $region40: #{tpu_custom_call.1} parent=31 // pred_fallthru
          _
        %s189 = sand.u32 %s16, 1
        %s190 = scalar_lea.sflag [#allocation3], %s189
        %s191 = sand.u32 %s66, 1
        %s192 = smul.addr %s191, 128
        %s193 = scalar_lea.vmem [#allocation6], %s192
        // Predicated region
        $region41: #{tpu_custom_call.1} parent=31 // pred_check
          %p194 = pneg %p79
        $region42: #{tpu_custom_call.1} parent=31 // pred_check_branch
          %196 = sbr.rel (%p194) target = $region44
        $region43: #{tpu_custom_call.1} parent=31 // pred_region
          %198 = dma.done %s190, 2048
        $region44: #{tpu_custom_call.1} parent=31 // pred_fallthru
          _
        %p199 = pneg %p32
        %p200 = pneg %p29
        %p201 = pneg %p53
        %p202 = pneg %p50
        %s203 = sand.u32 %s16, 1
        %s204 = scalar_lea.sflag [#allocation3], %s203
        %s205 = sand.u32 %s66, 1
        %s206 = smul.addr %s205, 128
        %s207 = scalar_lea.vmem [#allocation6], %s206
        %p208 = pneg %p79
        %p209 = pneg %p76
        %p210 = pneg %p105
        %p211 = pneg %p102
        %p212 = scmp.lt.s32.totalorder %s16, 1
        %s213 = scalar_select %p212, %s16, 1
        %s214 = smul.addr %s213, 27
        %s215 = smul.addr %s214, 8
        %s216 = scalar_lea.vmem %s3, %s215
        %p217 = scmp.lt.s32.totalorder %s16, 1
        %s218 = scalar_select %p217, %s16, 1
        %s219 = smul.addr %s218, 27
        %s220 = smul.addr %s219, 8
        %s221 = scalar_lea.vmem %s3, %s220
        %v222 = vld [vmem:[%s193] sm:$0xff]
        %v223 = vld [vmem:[%s193 + $0x8] sm:$0xff]
        %v224 = vld [vmem:[%s193 + $0x10] sm:$0xff]
        %v225 = vld [vmem:[%s193 + $0x18] sm:$0xff]
        %v226 = vld [vmem:[%s193 + $0x20] sm:$0xff]
        %v227 = vld [vmem:[%s193 + $0x28] sm:$0xff]
        %v228 = vld [vmem:[%s193 + $0x30] sm:$0xff]
        %v229 = vld [vmem:[%s193 + $0x38] sm:$0xff]
        %v230 = vld [vmem:[%s193 + $0x40] sm:$0xff]
        %v231 = vld [vmem:[%s193 + $0x48] sm:$0xff]
        %v232 = vld [vmem:[%s193 + $0x50] sm:$0xff]
        %v233 = vld [vmem:[%s193 + $0x58] sm:$0xff]
        %v234 = vld [vmem:[%s193 + $0x60] sm:$0xff]
        %v235 = vld [vmem:[%s193 + $0x68] sm:$0xff]
        %v236 = vld [vmem:[%s193 + $0x70] sm:$0xff]
        %v237 = vld [vmem:[%s193 + $0x78] sm:$0xff]
        %v238 = vld [vmem:[#allocation2] sm:$0xff]
        %v239 = vld [vmem:[#allocation2 + $0x8] sm:$0xff]
        %v240 = vld [vmem:[#allocation2 + $0x10] sm:$0xff]
        %v241 = vld [vmem:[#allocation2 + $0x18] sm:$0xff]
        %vm242 = vcmask 261120
        %v244 = vsel %vm242, %v222, 0
        %v247 = vsel %vm242, %v223, 0
        %v250 = vsel %vm242, %v224, 0
        %v253 = vsel %vm242, %v225, 0
        %v256 = vsel %vm242, %v226, 0
        %v259 = vsel %vm242, %v227, 0
        %v262 = vsel %vm242, %v228, 0
        %v265 = vsel %vm242, %v229, 0
        %v268 = vsel %vm242, %v230, 0
        %v271 = vsel %vm242, %v231, 0
        %v274 = vsel %vm242, %v232, 0
        %v277 = vsel %vm242, %v233, 0
        %v280 = vsel %vm242, %v234, 0
        %v283 = vsel %vm242, %v235, 0
        %v286 = vsel %vm242, %v236, 0
        %v289 = vsel %vm242, %v237, 0
        %291 = vmatpush.msra.mxu0 0.0
        %292 = vmatpush.msra.mxu0 0.0
        %293 = vmatpush.msra.mxu0 0.0
        %294 = vmatpush.msra.mxu0 0.0
        %295 = vmatpush.msra.mxu0 0.0
        %296 = vmatpush.msra.mxu0 0.0
        %297 = vmatpush.msra.mxu0 0.0
        %298 = vmatpush.msra.mxu0 0.0
        %299 = vmatpush.msra.mxu0 0.0
        %300 = vmatpush.msra.mxu0 0.0
        %301 = vmatpush.msra.mxu0 0.0
        %302 = vmatpush.msra.mxu0 0.0
        %303 = vmatpush.msra.mxu0 %v241
        %304 = vmatpush.msra.mxu0 %v240
        %305 = vmatpush.msra.mxu0 %v239
        %306 = vmatpush.msra.mxu0 %v238
        %307 = vmatmul.f32.gmra.mxu0 %v244
        %v308 = vpop.f32.mrf.mxu0
        %v309 = vadd.f32 0.0, %v308
        %310 = vmatmul.f32.gmra.mxu0 %v247
        %v311 = vpop.f32.mrf.mxu0
        %v312 = vadd.f32 0.0, %v311
        %313 = vmatmul.f32.gmra.mxu0 %v250
        %v314 = vpop.f32.mrf.mxu0
        %v315 = vadd.f32 0.0, %v314
        %316 = vmatmul.f32.gmra.mxu0 %v253
        %v317 = vpop.f32.mrf.mxu0
        %v318 = vadd.f32 0.0, %v317
        %319 = vmatmul.f32.gmra.mxu0 %v256
        %v320 = vpop.f32.mrf.mxu0
        %v321 = vadd.f32 0.0, %v320
        %322 = vmatmul.f32.gmra.mxu0 %v259
        %v323 = vpop.f32.mrf.mxu0
        %v324 = vadd.f32 0.0, %v323
        %325 = vmatmul.f32.gmra.mxu0 %v262
        %v326 = vpop.f32.mrf.mxu0
        %v327 = vadd.f32 0.0, %v326
        %328 = vmatmul.f32.gmra.mxu0 %v265
        %v329 = vpop.f32.mrf.mxu0
        %v330 = vadd.f32 0.0, %v329
        %331 = vmatmul.f32.gmra.mxu0 %v268
        %v332 = vpop.f32.mrf.mxu0
        %v333 = vadd.f32 0.0, %v332
        %334 = vmatmul.f32.gmra.mxu0 %v271
        %v335 = vpop.f32.mrf.mxu0
        %v336 = vadd.f32 0.0, %v335
        %337 = vmatmul.f32.gmra.mxu0 %v274
        %v338 = vpop.f32.mrf.mxu0
        %v339 = vadd.f32 0.0, %v338
        %340 = vmatmul.f32.gmra.mxu0 %v277
        %v341 = vpop.f32.mrf.mxu0
        %v342 = vadd.f32 0.0, %v341
        %343 = vmatmul.f32.gmra.mxu0 %v280
        %v344 = vpop.f32.mrf.mxu0
        %v345 = vadd.f32 0.0, %v344
        %346 = vmatmul.f32.gmra.mxu0 %v283
        %v347 = vpop.f32.mrf.mxu0
        %v348 = vadd.f32 0.0, %v347
        %349 = vmatmul.f32.gmra.mxu0 %v286
        %v350 = vpop.f32.mrf.mxu0
        %351 = vmatmul.f32.gmra.mxu0 %v289
        %v352 = vpop.f32.mrf.mxu0
        %353 = vdwg.mxu0
        %s354 = scalar_lea.vmem [#allocation2], 32
        %v355 = vld [vmem:[%s354] sm:$0xff]
        %v356 = vld [vmem:[%s354 + $0x8] sm:$0xff]
        %v357 = vld [vmem:[%s354 + $0x10] sm:$0xff]
        %v358 = vld [vmem:[%s354 + $0x18] sm:$0xff]
        %359 = vmatpush.msra.mxu0 0.0
        %360 = vmatpush.msra.mxu0 0.0
        %361 = vmatpush.msra.mxu0 0.0
        %362 = vmatpush.msra.mxu0 0.0
        %363 = vmatpush.msra.mxu0 0.0
        %364 = vmatpush.msra.mxu0 0.0
        %365 = vmatpush.msra.mxu0 0.0
        %366 = vmatpush.msra.mxu0 0.0
        %367 = vmatpush.msra.mxu0 0.0
        %368 = vmatpush.msra.mxu0 0.0
        %369 = vmatpush.msra.mxu0 0.0
        %370 = vmatpush.msra.mxu0 0.0
        %371 = vmatpush.msra.mxu0 %v358
        %372 = vmatpush.msra.mxu0 %v357
        %373 = vmatpush.msra.mxu0 %v356
        %374 = vmatpush.msra.mxu0 %v355
        %375 = vmatmul.f32.gmra.mxu0 %v244
        %v376 = vpop.f32.mrf.mxu0
        %v377 = vadd.f32 0.0, %v376
        %378 = vmatmul.f32.gmra.mxu0 %v247
        %v379 = vpop.f32.mrf.mxu0
        %v380 = vadd.f32 0.0, %v379
        %381 = vmatmul.f32.gmra.mxu0 %v250
        %v382 = vpop.f32.mrf.mxu0
        %v383 = vadd.f32 0.0, %v382
        %384 = vmatmul.f32.gmra.mxu0 %v253
        %v385 = vpop.f32.mrf.mxu0
        %v386 = vadd.f32 0.0, %v385
        %387 = vmatmul.f32.gmra.mxu0 %v256
        %v388 = vpop.f32.mrf.mxu0
        %v389 = vadd.f32 0.0, %v388
        %390 = vmatmul.f32.gmra.mxu0 %v259
        %v391 = vpop.f32.mrf.mxu0
        %v392 = vadd.f32 0.0, %v391
        %393 = vmatmul.f32.gmra.mxu0 %v262
        %v394 = vpop.f32.mrf.mxu0
        %v395 = vadd.f32 0.0, %v394
        %396 = vmatmul.f32.gmra.mxu0 %v265
        %v397 = vpop.f32.mrf.mxu0
        %v398 = vadd.f32 0.0, %v397
        %399 = vmatmul.f32.gmra.mxu0 %v268
        %v400 = vpop.f32.mrf.mxu0
        %v401 = vadd.f32 0.0, %v400
        %402 = vmatmul.f32.gmra.mxu0 %v271
        %v403 = vpop.f32.mrf.mxu0
        %v404 = vadd.f32 0.0, %v403
        %405 = vmatmul.f32.gmra.mxu0 %v274
        %v406 = vpop.f32.mrf.mxu0
        %v407 = vadd.f32 0.0, %v406
        %408 = vmatmul.f32.gmra.mxu0 %v277
        %v409 = vpop.f32.mrf.mxu0
        %v410 = vadd.f32 0.0, %v409
        %411 = vmatmul.f32.gmra.mxu0 %v280
        %v412 = vpop.f32.mrf.mxu0
        %v413 = vadd.f32 0.0, %v412
        %414 = vmatmul.f32.gmra.mxu0 %v283
        %v415 = vpop.f32.mrf.mxu0
        %v416 = vadd.f32 0.0, %v415
        %417 = vmatmul.f32.gmra.mxu0 %v286
        %v418 = vpop.f32.mrf.mxu0
        %v419 = vadd.f32 0.0, %v418
        %420 = vmatmul.f32.gmra.mxu0 %v289
        %v421 = vpop.f32.mrf.mxu0
        %v422 = vadd.f32 0.0, %v421
        %423 = vdwg.mxu0
        %s424 = scalar_lea.vmem [#allocation2], 64
        %v425 = vld [vmem:[%s424] sm:$0xff]
        %v426 = vld [vmem:[%s424 + $0x8] sm:$0xff]
        %v427 = vld [vmem:[%s424 + $0x10] sm:$0xff]
        %v428 = vld [vmem:[%s424 + $0x18] sm:$0xff]
        %429 = vmatpush.msra.mxu0 0.0
        %430 = vmatpush.msra.mxu0 0.0
        %431 = vmatpush.msra.mxu0 0.0
        %432 = vmatpush.msra.mxu0 0.0
        %433 = vmatpush.msra.mxu0 0.0
        %434 = vmatpush.msra.mxu0 0.0
        %435 = vmatpush.msra.mxu0 0.0
        %436 = vmatpush.msra.mxu0 0.0
        %437 = vmatpush.msra.mxu0 0.0
        %438 = vmatpush.msra.mxu0 0.0
        %439 = vmatpush.msra.mxu0 0.0
        %440 = vmatpush.msra.mxu0 0.0
        %441 = vmatpush.msra.mxu0 %v428
        %442 = vmatpush.msra.mxu0 %v427
        %443 = vmatpush.msra.mxu0 %v426
        %444 = vmatpush.msra.mxu0 %v425
        %445 = vmatmul.f32.gmra.mxu0 %v244
        %v446 = vpop.f32.mrf.mxu0
        %447 = vmatmul.f32.gmra.mxu0 %v247
        %v448 = vpop.f32.mrf.mxu0
        %449 = vmatmul.f32.gmra.mxu0 %v250
        %v450 = vpop.f32.mrf.mxu0
        %v451 = vadd.f32 0.0, %v450
        %452 = vmatmul.f32.gmra.mxu0 %v253
        %v453 = vpop.f32.mrf.mxu0
        %v454 = vadd.f32 0.0, %v453
        %455 = vmatmul.f32.gmra.mxu0 %v256
        %v456 = vpop.f32.mrf.mxu0
        %v457 = vadd.f32 0.0, %v456
        %458 = vmatmul.f32.gmra.mxu0 %v259
        %v459 = vpop.f32.mrf.mxu0
        %v460 = vadd.f32 0.0, %v459
        %461 = vmatmul.f32.gmra.mxu0 %v262
        %v462 = vpop.f32.mrf.mxu0
        %v463 = vadd.f32 0.0, %v462
        %464 = vmatmul.f32.gmra.mxu0 %v265
        %v465 = vpop.f32.mrf.mxu0
        %v466 = vadd.f32 0.0, %v465
        %467 = vmatmul.f32.gmra.mxu0 %v268
        %v468 = vpop.f32.mrf.mxu0
        %v469 = vadd.f32 0.0, %v468
        %470 = vmatmul.f32.gmra.mxu0 %v271
        %v471 = vpop.f32.mrf.mxu0
        %v472 = vadd.f32 0.0, %v471
        %473 = vmatmul.f32.gmra.mxu0 %v274
        %v474 = vpop.f32.mrf.mxu0
        %v475 = vadd.f32 0.0, %v474
        %476 = vmatmul.f32.gmra.mxu0 %v277
        %v477 = vpop.f32.mrf.mxu0
        %v478 = vadd.f32 0.0, %v477
        %479 = vmatmul.f32.gmra.mxu0 %v280
        %v480 = vpop.f32.mrf.mxu0
        %v481 = vadd.f32 0.0, %v480
        %482 = vmatmul.f32.gmra.mxu0 %v283
        %v483 = vpop.f32.mrf.mxu0
        %v484 = vadd.f32 0.0, %v483
        %485 = vmatmul.f32.gmra.mxu0 %v286
        %v486 = vpop.f32.mrf.mxu0
        %v487 = vadd.f32 0.0, %v486
        %488 = vmatmul.f32.gmra.mxu0 %v289
        %v489 = vpop.f32.mrf.mxu0
        %v490 = vadd.f32 0.0, %v489
        %491 = vdwg.mxu0
        %v492 = vadd.f32 %v377, 0.0
        %v493 = vadd.f32 %v380, 0.0
        %v494 = vadd.f32 %v309, %v383
        %v495 = vadd.f32 %v312, %v386
        %v496 = vadd.f32 %v315, %v389
        %v497 = vadd.f32 %v318, %v392
        %v498 = vadd.f32 %v321, %v395
        %v499 = vadd.f32 %v324, %v398
        %v500 = vadd.f32 %v327, %v401
        %v501 = vadd.f32 %v330, %v404
        %v502 = vadd.f32 %v333, %v407
        %v503 = vadd.f32 %v336, %v410
        %v504 = vadd.f32 %v339, %v413
        %v505 = vadd.f32 %v342, %v416
        %v506 = vadd.f32 %v345, %v419
        %v507 = vadd.f32 %v348, %v422
        %v508 = vadd.f32 %v492, %v451
        %v509 = vadd.f32 %v493, %v454
        %v510 = vadd.f32 %v494, %v457
        %v511 = vadd.f32 %v495, %v460
        %v512 = vadd.f32 %v496, %v463
        %v513 = vadd.f32 %v497, %v466
        %v514 = vadd.f32 %v498, %v469
        %v515 = vadd.f32 %v499, %v472
        %v516 = vadd.f32 %v500, %v475
        %v517 = vadd.f32 %v501, %v478
        %v518 = vadd.f32 %v502, %v481
        %v519 = vadd.f32 %v503, %v484
        %v520 = vadd.f32 %v504, %v487
        %v521 = vadd.f32 %v505, %v490
        %v522 = vadd.f32 %v506, 0.0
        %v523 = vadd.f32 %v507, 0.0
        %vm540 = vcmask 1040384
        %v541 = vrot.slane %v508, 7
        %v542 = vrot.slane %v509, 7
        %v543 = vsel %vm540, %v541, %v542
        %v544 = vrot.slane %v510, 7
        %v545 = vrot.slane %v511, 7
        %v546 = vsel %vm540, %v544, %v545
        %v547 = vrot.slane %v512, 7
        %v548 = vrot.slane %v513, 7
        %v549 = vsel %vm540, %v547, %v548
        %v550 = vrot.slane %v514, 7
        %v551 = vrot.slane %v515, 7
        %v552 = vsel %vm540, %v550, %v551
        %v553 = vrot.slane %v516, 7
        %v554 = vrot.slane %v517, 7
        %v555 = vsel %vm540, %v553, %v554
        %v556 = vrot.slane %v518, 7
        %v557 = vrot.slane %v519, 7
        %v558 = vsel %vm540, %v556, %v557
        %v559 = vrot.slane %v520, 7
        %v560 = vrot.slane %v521, 7
        %v561 = vsel %vm540, %v559, %v560
        %v562 = vrot.slane %v522, 7
        %v563 = vrot.slane %v523, 7
        %v564 = vsel %vm540, %v562, %v563
        %v589 = vsel %vm540, 0.0, %v541
        %v590 = vsel %vm540, 0.0, %v544
        %v591 = vsel %vm540, 0.0, %v547
        %v592 = vsel %vm540, 0.0, %v550
        %v593 = vsel %vm540, 0.0, %v553
        %v594 = vsel %vm540, 0.0, %v556
        %v595 = vsel %vm540, 0.0, %v559
        %v596 = vsel %vm540, 0.0, %v562
        %v597 = vsel %vm540, %v542, 0.0
        %v598 = vsel %vm540, %v545, 0.0
        %v599 = vsel %vm540, %v548, 0.0
        %v600 = vsel %vm540, %v551, 0.0
        %v601 = vsel %vm540, %v554, 0.0
        %v602 = vsel %vm540, %v557, 0.0
        %v603 = vsel %vm540, %v560, 0.0
        %v604 = vsel %vm540, %v563, 0.0
        %v605 = vld [vmem:[#allocation4] sm:$0x1]
        %v607 = vperm.slane %v605, 0
        %v609 = vadd.f32 %v589, %v607
        %v610 = vadd.f32 %v543, %v607
        %v611 = vadd.f32 %v597, %v607
        %v612 = vadd.f32 %v590, %v607
        %v613 = vadd.f32 %v546, %v607
        %v614 = vadd.f32 %v598, %v607
        %v615 = vadd.f32 %v591, %v607
        %v616 = vadd.f32 %v549, %v607
        %v617 = vadd.f32 %v599, %v607
        %v618 = vadd.f32 %v592, %v607
        %v619 = vadd.f32 %v552, %v607
        %v620 = vadd.f32 %v600, %v607
        %v621 = vadd.f32 %v593, %v607
        %v622 = vadd.f32 %v555, %v607
        %v623 = vadd.f32 %v601, %v607
        %v624 = vadd.f32 %v594, %v607
        %v625 = vadd.f32 %v558, %v607
        %v626 = vadd.f32 %v602, %v607
        %v627 = vadd.f32 %v595, %v607
        %v628 = vadd.f32 %v561, %v607
        %v629 = vadd.f32 %v603, %v607
        %v630 = vadd.f32 %v596, %v607
        %v631 = vadd.f32 %v564, %v607
        %v632 = vadd.f32 %v604, %v607
        %633 = vst.msk [vmem:[%s221] sm:$0xff] %vm242, 0.0
        %634 = vst.msk [vmem:[%s221 + $0x8] sm:$0xff] %vm242, 0.0
        %vm635 = vcmask 254976
        %636 = vst.msk [vmem:[%s221 + $0x10] sm:$0x3] %vm635, 0.0
        %637 = vst.msk [vmem:[%s221 + $0x18] sm:$0xff] %vm242, %v609
        %638 = vst.msk [vmem:[%s221 + $0x20] sm:$0xff] %vm242, %v610
        %639 = vst.msk [vmem:[%s221 + $0x28] sm:$0x3] %vm635, %v611
        %640 = vst.msk [vmem:[%s221 + $0x30] sm:$0xff] %vm242, %v612
        %641 = vst.msk [vmem:[%s221 + $0x38] sm:$0xff] %vm242, %v613
        %642 = vst.msk [vmem:[%s221 + $0x40] sm:$0x3] %vm635, %v614
        %643 = vst.msk [vmem:[%s221 + $0x48] sm:$0xff] %vm242, %v615
        %644 = vst.msk [vmem:[%s221 + $0x50] sm:$0xff] %vm242, %v616
        %645 = vst.msk [vmem:[%s221 + $0x58] sm:$0x3] %vm635, %v617
        %646 = vst.msk [vmem:[%s221 + $0x60] sm:$0xff] %vm242, %v618
        %647 = vst.msk [vmem:[%s221 + $0x68] sm:$0xff] %vm242, %v619
        %648 = vst.msk [vmem:[%s221 + $0x70] sm:$0x3] %vm635, %v620
        %649 = vst.msk [vmem:[%s221 + $0x78] sm:$0xff] %vm242, %v621
        %650 = vst.msk [vmem:[%s221 + $0x80] sm:$0xff] %vm242, %v622
        %651 = vst.msk [vmem:[%s221 + $0x88] sm:$0x3] %vm635, %v623
        %652 = vst.msk [vmem:[%s221 + $0x90] sm:$0xff] %vm242, %v624
        %653 = vst.msk [vmem:[%s221 + $0x98] sm:$0xff] %vm242, %v625
        %654 = vst.msk [vmem:[%s221 + $0xa0] sm:$0x3] %vm635, %v626
        %655 = vst.msk [vmem:[%s221 + $0xa8] sm:$0xff] %vm242, %v627
        %656 = vst.msk [vmem:[%s221 + $0xb0] sm:$0xff] %vm242, %v628
        %657 = vst.msk [vmem:[%s221 + $0xb8] sm:$0x3] %vm635, %v629
        %658 = vst.msk [vmem:[%s221 + $0xc0] sm:$0xff] %vm242, %v630
        %659 = vst.msk [vmem:[%s221 + $0xc8] sm:$0xff] %vm242, %v631
        %660 = vst.msk [vmem:[%s221 + $0xd0] sm:$0x3] %vm635, %v632
        %p661 = scmp.lt.s32.totalorder %s16, 1
        %s662 = scalar_select %p661, %s16, 1
        %s663 = smul.addr %s662, 27
        %s664 = smul.addr %s663, 8
        %s665 = scalar_lea.vmem %s3, %s664
        // Predicated region
        $region45: #{tpu_custom_call.1} parent=31 // pred_check
          %p666 = pneg %p102
        $region46: #{tpu_custom_call.1} parent=31 // pred_check_branch
          %668 = sbr.rel (%p666) target = $region48
        $region47: #{tpu_custom_call.1} parent=31 // pred_region
          _
        $region48: #{tpu_custom_call.1} parent=31 // pred_fallthru
          _
      $region32: #{tpu_custom_call.1} parent=5 // pred_fallthru
        _
      %p669 = scmp.le.s32.totalorder 2, %s11
      // Predicated region
      $region49: #{tpu_custom_call.1} parent=5 // pred_check
        %p670 = pneg %p669
      $region50: #{tpu_custom_call.1} parent=5 // pred_check_branch
        %672 = sbr.rel (%p670) target = $region52
      $region51: #{tpu_custom_call.1} parent=5 // pred_region
        %s673 = ssub.s32 %s11, 2
        // Predicated region
        $region53: #{tpu_custom_call.1} parent=51 // pred_check
          %p674 = pneg %p108
        $region54: #{tpu_custom_call.1} parent=51 // pred_check_branch
          %676 = sbr.rel (%p674) target = $region56
        $region55: #{tpu_custom_call.1} parent=51 // pred_region
          %p677 = scmp.lt.s32.totalorder %s17, 1
          %s678 = scalar_select %p677, %s17, 1
          %s679 = smul.addr %s678, 27
          %s680 = smul.addr %s679, 8
          %s681 = scalar_lea.vmem %s3, %s680
        $region56: #{tpu_custom_call.1} parent=51 // pred_fallthru
          _
      $region52: #{tpu_custom_call.1} parent=5 // pred_fallthru
        _
    $region6: #{tpu_custom_call.1} parent=1 // loop_footer
      %s15 = sadd.s32 1, %s11
    $region7: #{tpu_custom_call.1} parent=1 // loop_footer_branch
      %10 = sbr.rel target = $region3
    $region8: #{tpu_custom_call.1} parent=1 // loop_exit
      _
    %682 = vsyncpa [#allocation3], 1
    %s683 = scalar_lea.sflag [#allocation3], 1
    %684 = vsyncpa %s683, 1
    %685 = vsyncpa [#allocation5], 1

</llo_original>
